<compile_context>
chip_gen: v6e
topology: v6e:2x2x1
jax: 0.10.0
libtpu: 0.0.40
codegen_flags: <defaults>
</compile_context>

<pallas_src>
import functools

import jax
import jax.numpy as jnp
from jax import lax
from jax.experimental import pallas as pl
from jax.experimental.pallas import tpu as pltpu

_SUBLANE = 8
_MAX_TILE_ROWS = 2048          # compile-time sanity cap on the unrolled reduce
_FALLBACK_VMEM = 64 * 1024 * 1024   # v7x-sized fallback (safe on every gen)


def _round_up(x, m):
    return (x + m - 1) // m * m


def _vmem_capacity_bytes():
    try:
        info = pltpu.get_tpu_info()
        cap = getattr(info, "vmem_capacity_bytes", None)
        if cap:
            return int(cap)
    except Exception:
        pass
    return _FALLBACK_VMEM


def _ntxent_rowsum_kernel(a_ref, zi_ref, zj_ref, sa_ref, sd_ref, *,
                          total_rows, tile_rows, needs_mask):
    """Per-tile: L2-normalize rows, reduce to one (8, F) partial row-sum block.

    Outputs: sa = sum of normalized anchor rows, sd = sum(zj1) - sum(zi1).
    Inputs are processed one at a time to keep only ~2 (TB, F) f32 temporaries
    live; the ragged last tile is masked (OOB rows may hold garbage).
    """
    if needs_mask:
        i = pl.program_id(0)
        valid = total_rows - i * tile_rows          # >= tile_rows except last tile
        row_ids = lax.broadcasted_iota(jnp.int32, (tile_rows, 1), 0)
        row_mask = row_ids < valid
    else:
        row_mask = None

    def norm_rowsum(ref):
        # Cast after the tile is in VMEM (HBM traffic stays at native width).
        x = ref[...].astype(jnp.float32)
        if row_mask is not None:
            # jnp.where *selects*, so NaN/Inf garbage in OOB rows is dropped.
            x = jnp.where(row_mask, x, 0.0)
        # torch F.normalize(p=2, dim=-1, eps=1e-12): x / max(||x||, 1e-12)
        # == x * rsqrt(max(||x||^2, 1e-24)); rsqrt runs on the EUP slot.
        ssq = jnp.sum(x * x, axis=-1, keepdims=True)
        x1 = x * lax.rsqrt(jnp.maximum(ssq, 1e-24))
        f = x1.shape[-1]
        # Reduce the TB-row tile to one sublane-aligned (8, F) partial block
        # (leading-dim split only -> pure vreg-aligned VPU adds, no relayout).
        return jnp.sum(x1.reshape(-1, _SUBLANE, f), axis=0)

    sa_ref[...] = norm_rowsum(a_ref)
    sd_ref[...] = norm_rowsum(zj_ref) - norm_rowsum(zi_ref)


def ntxent_loss_tc(anchor, zis, zjs, *, temperature):
    """Pallas implementation of NTXentLossTC.forward. Returns a scalar f32."""
    b = zis.shape[0]
    anchor2d = anchor.reshape(b, -1)
    zis2d = zis.reshape(b, -1)
    zjs2d = zjs.reshape(b, -1)
    f = zis2d.shape[1]
    itemsize = jnp.dtype(zis2d.dtype).itemsize

    # VMEM sizing: ~75% of physical capacity as the scoped limit (48 MiB on
    # v7x, 96 MiB on v5e/v6e), minus slack for output double-buffers/scratch.
    vmem_cap = _vmem_capacity_bytes()
    vmem_limit = min(vmem_cap * 3 // 4, vmem_cap - (8 << 20))
    tile_budget = max(vmem_limit - (4 << 20), 8 << 20)

    # Bytes per tile row: 3 inputs x 2 pipeline buffers (native dtype) plus
    # ~3 live (TB, F) f32 intermediates in the one-input-at-a-time body.
    bytes_per_row = 3 * 2 * f * itemsize + 3 * f * 4
    # TODO(synk): if a single 8-row tile exceeds the budget (enormous F), this
    # would need an additional F-tiling axis; not implemented here.
    tb = tile_budget // bytes_per_row
    tb = min(tb, _MAX_TILE_ROWS, _round_up(b, _SUBLANE))
    tb = max(_SUBLANE, (tb // _SUBLANE) * _SUBLANE)

    num_tiles = pl.cdiv(b, tb)
    needs_mask = (b % tb) != 0

    kernel = functools.partial(
        _ntxent_rowsum_kernel,
        total_rows=b, tile_rows=tb, needs_mask=needs_mask)

    # Full (unpadded) F as the last block dim (legal: block dim == array dim).
    in_spec = pl.BlockSpec((tb, f), lambda i: (i, 0))
    out_spec = pl.BlockSpec((_SUBLANE, f), lambda i: (i, 0))
    out_sds = jax.ShapeDtypeStruct((num_tiles * _SUBLANE, f), jnp.float32)

    sa, sd = pl.pallas_call(
        kernel,
        grid=(num_tiles,),
        in_specs=[in_spec, in_spec, in_spec],
        out_specs=[out_spec, out_spec],
        out_shape=[out_sds, out_sds],
        compiler_params=pltpu.CompilerParams(
            dimension_semantics=("parallel",),
            vmem_limit_bytes=int(vmem_limit),
        ),
    )(anchor2d, zis2d, zjs2d)

    # Tiny final combine: (sum_i a1_i) . (sum_j (zj1_j - zi1_j)) / (T * B^2).
    s_a = jnp.sum(sa, axis=0)
    s_d = jnp.sum(sd, axis=0)
    return jnp.dot(s_a, s_d) / (temperature * float(b) * float(b))


def _reference(anchor, zis, zjs, temperature):
    # Direct transcription of the PyTorch module (including exp/log form).
    b = zis.shape[0]
    a = anchor.reshape(b, -1).astype(jnp.float32)
    zi = zis.reshape(b, -1).astype(jnp.float32)
    zj = zjs.reshape(b, -1).astype(jnp.float32)

    def norm(x):
        n = jnp.maximum(jnp.linalg.norm(x, axis=-1, keepdims=True), 1e-12)
        return x / n

    a1, zi1, zj1 = norm(a), norm(zi), norm(zj)
    pos = (a1 @ zi1.T) / temperature
    neg = (a1 @ zj1.T) / temperature
    return (-jnp.log(jnp.exp(pos) / jnp.exp(neg))).mean()


if __name__ == "__main__":
    temperature = 0.5
    key = jax.random.PRNGKey(0)

    # Case 1: module-implied small shape (B, T, D) flattened to (B, T*D).
    B, T, D = 2, 8, 32
    k1, k2, k3, k4, k5, k6 = jax.random.split(key, 6)
    anchor = jax.random.normal(k1, (B, T, D), dtype=jnp.float32)
    zis = jax.random.normal(k2, (B, T, D), dtype=jnp.float32)
    zjs = jax.random.normal(k3, (B, T, D), dtype=jnp.float32)

    out = jax.block_until_ready(ntxent_loss_tc(anchor, zis, zjs,
                                               temperature=temperature))
    ref = _reference(anchor, zis, zjs, temperature)
    assert jnp.allclose(out, ref, atol=1e-5, rtol=1e-5), (out, ref)

    # Case 2: ragged shape (B not a multiple of 8, F not a multiple of 128)
    # exercising the in-kernel row mask and the full-F block path.
    B2, T2, D2 = 5, 4, 37
    anchor2 = jax.random.normal(k4, (B2, T2, D2), dtype=jnp.float32)
    zis2 = jax.random.normal(k5, (B2, T2, D2), dtype=jnp.float32)
    zjs2 = jax.random.normal(k6, (B2, T2, D2), dtype=jnp.float32)

    out2 = jax.block_until_ready(ntxent_loss_tc(anchor2, zis2, zjs2,
                                                temperature=temperature))
    ref2 = _reference(anchor2, zis2, zjs2, temperature)
    assert jnp.allclose(out2, ref2, atol=1e-5, rtol=1e-5), (out2, ref2)

    print("KERNEL_OK")
</pallas_src>

<mosaic_0001>
module attributes {stable_mosaic.version = 11 : i64} {
  func.func @_ntxent_rowsum_kernel(%arg0: i32, %arg1: memref<8x256xf32, #tpu.memory_space<vmem>>, %arg2: memref<8x256xf32, #tpu.memory_space<vmem>>, %arg3: memref<8x256xf32, #tpu.memory_space<vmem>>, %arg4: memref<8x256xf32, #tpu.memory_space<vmem>>, %arg5: memref<8x256xf32, #tpu.memory_space<vmem>>) attributes {dimension_semantics = [#tpu.dimension_semantics<parallel>], iteration_bounds = array<i64: 1>, scalar_prefetch = 0 : i64, scratch_operands = 0 : i64, tpu.core_type = #tpu.core_type<tc>, window_params = [{transform_indices = @transform_0, window_bounds = array<i64: 8, 256>}, {transform_indices = @transform_1, window_bounds = array<i64: 8, 256>}, {transform_indices = @transform_2, window_bounds = array<i64: 8, 256>}, {transform_indices = @transform_3, window_bounds = array<i64: 8, 256>}, {transform_indices = @transform_4, window_bounds = array<i64: 8, 256>}]} {
    %c8_i32 = arith.constant 8 : i32
    %0 = arith.muli %arg0, %c8_i32 : i32
    %c2_i32 = arith.constant 2 : i32
    %1 = arith.subi %c2_i32, %0 : i32
    %2 = tpu.iota {dimensions = array<i32: 0>} : vector<8x1xi32>
    %3 = vector.broadcast %1 : i32 to vector<8x1xi32>
    %4 = arith.cmpi slt, %2, %3 : vector<8x1xi32>
    %c0 = arith.constant 0 : index
    %c0_0 = arith.constant 0 : index
    %5 = vector.load %arg1[%c0, %c0_0] : memref<8x256xf32, #tpu.memory_space<vmem>>, vector<8x256xf32>
    %cst = arith.constant 0.000000e+00 : f32
    %6 = vector.shape_cast %4 : vector<8x1xi1> to vector<8x1xi1>
    %7 = vector.broadcast %6 : vector<8x1xi1> to vector<8x256xi1>
    %8 = vector.broadcast %cst : f32 to vector<8x256xf32>
    %9 = arith.select %7, %5, %8 : vector<8x256xi1>, vector<8x256xf32>
    %10 = arith.mulf %9, %9 : vector<8x256xf32>
    %cst_1 = arith.constant dense<0.000000e+00> : vector<8xf32>
    %11 = vector.multi_reduction <add>, %10, %cst_1 [1] : vector<8x256xf32> to vector<8xf32>
    %12 = vector.shape_cast %11 : vector<8xf32> to vector<8x1xf32>
    %cst_2 = arith.constant 1.000000e-24 : f32
    %13 = vector.broadcast %cst_2 : f32 to vector<8x1xf32>
    %14 = arith.maximumf %12, %13 : vector<8x1xf32>
    %15 = math.rsqrt %14 : vector<8x1xf32>
    %16 = vector.broadcast %15 : vector<8x1xf32> to vector<8x256xf32>
    %17 = arith.mulf %9, %16 : vector<8x256xf32>
    %18 = vector.shape_cast %17 : vector<8x256xf32> to vector<1x8x256xf32>
    %cst_3 = arith.constant dense<0.000000e+00> : vector<8x256xf32>
    %19 = vector.multi_reduction <add>, %18, %cst_3 [0] : vector<1x8x256xf32> to vector<8x256xf32>
    %c0_4 = arith.constant 0 : index
    %c0_5 = arith.constant 0 : index
    %20 = vector.load %arg4[%c0_4, %c0_5] : memref<8x256xf32, #tpu.memory_space<vmem>>, vector<8x256xf32>
    tpu.vector_store %arg4[%c0_4, %c0_5], %19 {strides = array<i32>} : memref<8x256xf32, #tpu.memory_space<vmem>>, vector<8x256xf32>,
    %c0_6 = arith.constant 0 : index
    %c0_7 = arith.constant 0 : index
    %21 = vector.load %arg3[%c0_6, %c0_7] : memref<8x256xf32, #tpu.memory_space<vmem>>, vector<8x256xf32>
    %cst_8 = arith.constant 0.000000e+00 : f32
    %22 = vector.shape_cast %4 : vector<8x1xi1> to vector<8x1xi1>
    %23 = vector.broadcast %22 : vector<8x1xi1> to vector<8x256xi1>
    %24 = vector.broadcast %cst_8 : f32 to vector<8x256xf32>
    %25 = arith.select %23, %21, %24 : vector<8x256xi1>, vector<8x256xf32>
    %26 = arith.mulf %25, %25 : vector<8x256xf32>
    %cst_9 = arith.constant dense<0.000000e+00> : vector<8xf32>
    %27 = vector.multi_reduction <add>, %26, %cst_9 [1] : vector<8x256xf32> to vector<8xf32>
    %28 = vector.shape_cast %27 : vector<8xf32> to vector<8x1xf32>
    %cst_10 = arith.constant 1.000000e-24 : f32
    %29 = vector.broadcast %cst_10 : f32 to vector<8x1xf32>
    %30 = arith.maximumf %28, %29 : vector<8x1xf32>
    %31 = math.rsqrt %30 : vector<8x1xf32>
    %32 = vector.broadcast %31 : vector<8x1xf32> to vector<8x256xf32>
    %33 = arith.mulf %25, %32 : vector<8x256xf32>
    %34 = vector.shape_cast %33 : vector<8x256xf32> to vector<1x8x256xf32>
    %cst_11 = arith.constant dense<0.000000e+00> : vector<8x256xf32>
    %35 = vector.multi_reduction <add>, %34, %cst_11 [0] : vector<1x8x256xf32> to vector<8x256xf32>
    %c0_12 = arith.constant 0 : index
    %c0_13 = arith.constant 0 : index
    %36 = vector.load %arg2[%c0_12, %c0_13] : memref<8x256xf32, #tpu.memory_space<vmem>>, vector<8x256xf32>
    %cst_14 = arith.constant 0.000000e+00 : f32
    %37 = vector.shape_cast %4 : vector<8x1xi1> to vector<8x1xi1>
    %38 = vector.broadcast %37 : vector<8x1xi1> to vector<8x256xi1>
    %39 = vector.broadcast %cst_14 : f32 to vector<8x256xf32>
    %40 = arith.select %38, %36, %39 : vector<8x256xi1>, vector<8x256xf32>
    %41 = arith.mulf %40, %40 : vector<8x256xf32>
    %cst_15 = arith.constant dense<0.000000e+00> : vector<8xf32>
    %42 = vector.multi_reduction <add>, %41, %cst_15 [1] : vector<8x256xf32> to vector<8xf32>
    %43 = vector.shape_cast %42 : vector<8xf32> to vector<8x1xf32>
    %cst_16 = arith.constant 1.000000e-24 : f32
    %44 = vector.broadcast %cst_16 : f32 to vector<8x1xf32>
    %45 = arith.maximumf %43, %44 : vector<8x1xf32>
    %46 = math.rsqrt %45 : vector<8x1xf32>
    %47 = vector.broadcast %46 : vector<8x1xf32> to vector<8x256xf32>
    %48 = arith.mulf %40, %47 : vector<8x256xf32>
    %49 = vector.shape_cast %48 : vector<8x256xf32> to vector<1x8x256xf32>
    %cst_17 = arith.constant dense<0.000000e+00> : vector<8x256xf32>
    %50 = vector.multi_reduction <add>, %49, %cst_17 [0] : vector<1x8x256xf32> to vector<8x256xf32>
    %51 = arith.subf %35, %50 : vector<8x256xf32>
    %c0_18 = arith.constant 0 : index
    %c0_19 = arith.constant 0 : index
    %52 = vector.load %arg5[%c0_18, %c0_19] : memref<8x256xf32, #tpu.memory_space<vmem>>, vector<8x256xf32>
    tpu.vector_store %arg5[%c0_18, %c0_19], %51 {strides = array<i32>} : memref<8x256xf32, #tpu.memory_space<vmem>>, vector<8x256xf32>,
    return
  }
  func.func @transform_0(%arg0: i32) -> (i32, i32) {
    %c0_i32 = arith.constant 0 : i32
    %c0_i32_0 = arith.constant 0 : i32
    return %arg0, %c0_i32 : i32, i32
  }
  func.func @transform_1(%arg0: i32) -> (i32, i32) {
    %c0_i32 = arith.constant 0 : i32
    %c0_i32_0 = arith.constant 0 : i32
    return %arg0, %c0_i32 : i32, i32
  }
  func.func @transform_2(%arg0: i32) -> (i32, i32) {
    %c0_i32 = arith.constant 0 : i32
    %c0_i32_0 = arith.constant 0 : i32
    return %arg0, %c0_i32 : i32, i32
  }
  func.func @transform_3(%arg0: i32) -> (i32, i32) {
    %c0_i32 = arith.constant 0 : i32
    %c0_i32_0 = arith.constant 0 : i32
    return %arg0, %c0_i32 : i32, i32
  }
  func.func @transform_4(%arg0: i32) -> (i32, i32) {
    %c0_i32 = arith.constant 0 : i32
    %c0_i32_0 = arith.constant 0 : i32
    return %arg0, %c0_i32 : i32, i32
  }
}

</mosaic_0001>

<llo_original>
// kernel: tpu_custom_call.1
$region0: #{tpu_custom_call.1}
  #allocation0 [shape = 'u32[]', space=smem, size = 0x4, offset = 0x4, fixed_abs, tag = 'smem constant byte address 0x4 - core index']
  #allocation1 [shape = 'u32[144,128]{1,0:T(1,128)}', space=vmem, size = 0x12000, scoped, tag = 'internal scratch']
  %s0 = inlined_call_operand.hbm [shape: f32[2,256], index: 0, kind: input, shape index: {}]
  %s1 = inlined_call_operand.hbm [shape: f32[2,256], index: 1, kind: input, shape index: {}]
  %s2 = inlined_call_operand.hbm [shape: f32[2,256], index: 2, kind: input, shape index: {}]
  %s3 = inlined_call_operand.hbm [shape: f32[8,256], index: 3, kind: output, shape index: {0}]
  %s4 = inlined_call_operand.hbm [shape: f32[8,256], index: 4, kind: output, shape index: {1}]
  %5 = xla_tuple %s3, %s4
  %s6 = sld [smem:[#allocation0]]
  $region42: #{tpu_custom_call.1} parent=0
    _
  %s8 = ssub.s32 1, %s6
  %s9 = scalar_select 0, %s8, %s6
  $region1: #{tpu_custom_call.1} parent=0
    #allocation2 [shape = 'u8[8192]{0}', space=vmem, size = 0x2000, scoped, tag = 'input window, operand 0, single buffered']
    #allocation3 [shape = 's32[1]{0}', space=sflag, size = 0x4, scoped, tag = 'scoped memory for tpu_custom_call.1']
    #allocation4 [shape = 's32[1]{0}', space=sflag, size = 0x4, scoped, tag = 'scoped memory for tpu_custom_call.1']
    #allocation5 [shape = 'u8[8192]{0}', space=vmem, size = 0x2000, scoped, tag = 'input window, operand 1, single buffered']
    #allocation6 [shape = 's32[1]{0}', space=sflag, size = 0x4, scoped, tag = 'scoped memory for tpu_custom_call.1']
    #allocation7 [shape = 'u8[8192]{0}', space=vmem, size = 0x2000, scoped, tag = 'input window, operand 2, single buffered']
    #allocation8 [shape = 'u8[8192]{0}', space=vmem, size = 0x2000, scoped, tag = 'output window, operand 0, single buffered']
    #allocation9 [shape = 'u8[8192]{0}', space=vmem, size = 0x2000, scoped, tag = 'output window, operand 1, single buffered']
    #allocation10 [shape = 's32[1]{0}', space=sflag, size = 0x4, scoped, tag = 'scoped memory for tpu_custom_call.1']
    %10 = vsyncpa [#allocation3], 0
    %11 = vsyncpa [#allocation6], 0
    %12 = vsyncpa [#allocation4], 0
    %13 = vsyncpa [#allocation10], 0
    // Predicated region
    $region2: #{tpu_custom_call.1} parent=1 // pred_check
      _
    $region3: #{tpu_custom_call.1} parent=1 // pred_check_branch
      %15 = sbr.rel (0) target = $region5
    $region4: #{tpu_custom_call.1} parent=1 // pred_region
      %s17 = ssub.s32 256, 64
      %18 = vsyncadd [#allocation3], %s17
      %s19 = sshll.u32 [#allocation2], 4
      %s20 = int_to_ptr.vmem [resolvable:$true] %s19
      %25 = dma.hbm_to_vmem [thread:$0]  %s0, 64, %s20, [#allocation3], 64, 64, 4
    $region5: #{tpu_custom_call.1} parent=1 // pred_fallthru
      _
    // Predicated region
    $region6: #{tpu_custom_call.1} parent=1 // pred_check
      _
    $region7: #{tpu_custom_call.1} parent=1 // pred_check_branch
      %27 = sbr.rel (0) target = $region9
    $region8: #{tpu_custom_call.1} parent=1 // pred_region
      %s29 = ssub.s32 256, 64
      %30 = vsyncadd [#allocation6], %s29
      %s31 = sshll.u32 [#allocation5], 4
      %s32 = int_to_ptr.vmem [resolvable:$true] %s31
      %37 = dma.hbm_to_vmem [thread:$0]  %s1, 64, %s32, [#allocation6], 64, 64, 4
    $region9: #{tpu_custom_call.1} parent=1 // pred_fallthru
      _
    // Predicated region
    $region10: #{tpu_custom_call.1} parent=1 // pred_check
      _
    $region11: #{tpu_custom_call.1} parent=1 // pred_check_branch
      %39 = sbr.rel (0) target = $region13
    $region12: #{tpu_custom_call.1} parent=1 // pred_region
      %s41 = ssub.s32 256, 64
      %42 = vsyncadd [#allocation6], %s41
      %s43 = sshll.u32 [#allocation7], 4
      %s44 = int_to_ptr.vmem [resolvable:$true] %s43
      %49 = dma.hbm_to_vmem [thread:$0]  %s2, 64, %s44, [#allocation6], 64, 64, 4
    $region13: #{tpu_custom_call.1} parent=1 // pred_fallthru
      _
    // Predicated region
    $region14: #{tpu_custom_call.1} parent=1 // pred_check
      _
    $region15: #{tpu_custom_call.1} parent=1 // pred_check_branch
      %51 = sbr.rel (0) target = $region17
    $region16: #{tpu_custom_call.1} parent=1 // pred_region
      %52 = dma.done [#allocation3], 256
    $region17: #{tpu_custom_call.1} parent=1 // pred_fallthru
      _
    // Predicated region
    $region18: #{tpu_custom_call.1} parent=1 // pred_check
      _
    $region19: #{tpu_custom_call.1} parent=1 // pred_check_branch
      %54 = sbr.rel (0) target = $region21
    $region20: #{tpu_custom_call.1} parent=1 // pred_region
      %55 = dma.done [#allocation6], 256
    $region21: #{tpu_custom_call.1} parent=1 // pred_fallthru
      _
    // Predicated region
    $region22: #{tpu_custom_call.1} parent=1 // pred_check
      _
    $region23: #{tpu_custom_call.1} parent=1 // pred_check_branch
      %57 = sbr.rel (0) target = $region25
    $region24: #{tpu_custom_call.1} parent=1 // pred_region
      %58 = dma.done [#allocation6], 256
    $region25: #{tpu_custom_call.1} parent=1 // pred_fallthru
      _
    %s59 = smul.u32 0, 8
    %s60 = ssub.s32 2, %s59
    %v61 = vlaneseq
    %v62 = vshrl.u32 %v61, 7
    %v63 = vstv %s60
    %vm64 = vcmp.lt.s32.totalorder %v62, %v63
    %v65 = vld [vmem:[#allocation2] sm:$0xf]
    %v66 = vld [vmem:[#allocation2 + $0x4] sm:$0xf]
    %v67 = vld [vmem:[#allocation2 + $0x8] sm:$0xf]
    %v68 = vld [vmem:[#allocation2 + $0xc] sm:$0xf]
    %v69 = vsel %vm64, 1, 0
    %vm70 = vcmp.eq.s32.totalorder %v69, 1
    %v75 = vcombine.low %v65, %v66
    %v76 = vcombine.low %v67, %v68
    %v78 = vunpack.c.l.s4 1983009808
    %v79 = vunpack.c.0.s8 %v78
    %v80 = vlaneseq
    %v81 = vshrl.u32 %v80, 7
    %v82 = vsub.s32 %v79, %v81
    %v83 = vrot.slane %v75, %v82
    %v85 = vunpack.c.l.s4 1983009808
    %v86 = vunpack.c.0.s8 %v85
    %v87 = vlaneseq
    %v88 = vshrl.u32 %v87, 7
    %v89 = vsub.s32 %v86, %v88
    %v90 = vrot.slane %v76, %v89
    %v91 = vcombine.low %v83, %v90
    %v92 = vcombine.high %v83, %v90
    %v95 = vsel %vm70, %v91, 0.0
    %v96 = vsel %vm70, %v92, 0.0
    %v97 = vmul.f32 %v95, %v95
    %v98 = vmul.f32 %v96, %v96
    %v99 = vadd.f32 %v97, %v98
    %100 = vadd.xlane.f32.xlu0 %v99
    %v101 = vpop.xlane.xlu0 %100
    %v102 = vmax.f32 %v101, 1e-24
    %v103 = vrsqrt.pop %v102
    %v104 = vmul.f32 %v95, %v103
    %v105 = vmul.f32 %v96, %v103
    %v106 = vadd.f32 %v104, 0.0
    %v107 = vadd.f32 %v105, 0.0
    %108 = vst [vmem:[#allocation8] sm:$0xff] %v106
    %109 = vst [vmem:[#allocation8 + $0x8] sm:$0xff] %v107
    %v110 = vld [vmem:[#allocation7] sm:$0xf]
    %v111 = vld [vmem:[#allocation7 + $0x4] sm:$0xf]
    %v112 = vld [vmem:[#allocation7 + $0x8] sm:$0xf]
    %v113 = vld [vmem:[#allocation7 + $0xc] sm:$0xf]
    %v118 = vcombine.low %v110, %v111
    %v119 = vcombine.low %v112, %v113
    %v121 = vunpack.c.l.s4 1983009808
    %v122 = vunpack.c.0.s8 %v121
    %v123 = vlaneseq
    %v124 = vshrl.u32 %v123, 7
    %v125 = vsub.s32 %v122, %v124
    %v126 = vrot.slane %v118, %v125
    %v128 = vunpack.c.l.s4 1983009808
    %v129 = vunpack.c.0.s8 %v128
    %v130 = vlaneseq
    %v131 = vshrl.u32 %v130, 7
    %v132 = vsub.s32 %v129, %v131
    %v133 = vrot.slane %v119, %v132
    %v134 = vcombine.low %v126, %v133
    %v135 = vcombine.high %v126, %v133
    %v138 = vsel %vm70, %v134, 0.0
    %v139 = vsel %vm70, %v135, 0.0
    %v140 = vmul.f32 %v138, %v138
    %v141 = vmul.f32 %v139, %v139
    %v142 = vadd.f32 %v140, %v141
    %143 = vadd.xlane.f32.xlu0 %v142
    %v144 = vpop.xlane.xlu0 %143
    %v145 = vmax.f32 %v144, 1e-24
    %v146 = vrsqrt.pop %v145
    %v147 = vmul.f32 %v138, %v146
    %v148 = vmul.f32 %v139, %v146
    %v149 = vadd.f32 %v147, 0.0
    %v150 = vadd.f32 %v148, 0.0
    %v151 = vld [vmem:[#allocation5] sm:$0xf]
    %v152 = vld [vmem:[#allocation5 + $0x4] sm:$0xf]
    %v153 = vld [vmem:[#allocation5 + $0x8] sm:$0xf]
    %v154 = vld [vmem:[#allocation5 + $0xc] sm:$0xf]
    %v159 = vcombine.low %v151, %v152
    %v160 = vcombine.low %v153, %v154
    %v162 = vunpack.c.l.s4 1983009808
    %v163 = vunpack.c.0.s8 %v162
    %v164 = vlaneseq
    %v165 = vshrl.u32 %v164, 7
    %v166 = vsub.s32 %v163, %v165
    %v167 = vrot.slane %v159, %v166
    %v169 = vunpack.c.l.s4 1983009808
    %v170 = vunpack.c.0.s8 %v169
    %v171 = vlaneseq
    %v172 = vshrl.u32 %v171, 7
    %v173 = vsub.s32 %v170, %v172
    %v174 = vrot.slane %v160, %v173
    %v175 = vcombine.low %v167, %v174
    %v176 = vcombine.high %v167, %v174
    %v179 = vsel %vm70, %v175, 0.0
    %v180 = vsel %vm70, %v176, 0.0
    %v181 = vmul.f32 %v179, %v179
    %v182 = vmul.f32 %v180, %v180
    %v183 = vadd.f32 %v181, %v182
    %184 = vadd.xlane.f32.xlu0 %v183
    %v185 = vpop.xlane.xlu0 %184
    %v186 = vmax.f32 %v185, 1e-24
    %v187 = vrsqrt.pop %v186
    %v188 = vmul.f32 %v179, %v187
    %v189 = vmul.f32 %v180, %v187
    %v190 = vadd.f32 %v188, 0.0
    %v191 = vadd.f32 %v189, 0.0
    %v192 = vsub.f32 %v149, %v190
    %v193 = vsub.f32 %v150, %v191
    %194 = vst [vmem:[#allocation9] sm:$0xff] %v192
    %195 = vst [vmem:[#allocation9 + $0x8] sm:$0xff] %v193
    // Predicated region
    $region26: #{tpu_custom_call.1} parent=1 // pred_check
      _
    $region27: #{tpu_custom_call.1} parent=1 // pred_check_branch
      %197 = sbr.rel (0) target = $region29
    $region28: #{tpu_custom_call.1} parent=1 // pred_region
      %s199 = ssub.s32 256, 256
      %200 = vsyncadd [#allocation4], %s199
      %s202 = sshll.u32 [#allocation8], 4
      %s203 = int_to_ptr.vmem [resolvable:$true] %s202
      %205 = dma.vmem_to_hbm [thread:$0]  %s203, 256, %s3, [#allocation4]
    $region29: #{tpu_custom_call.1} parent=1 // pred_fallthru
      _
    // Predicated region
    $region30: #{tpu_custom_call.1} parent=1 // pred_check
      _
    $region31: #{tpu_custom_call.1} parent=1 // pred_check_branch
      %207 = sbr.rel (0) target = $region33
    $region32: #{tpu_custom_call.1} parent=1 // pred_region
      %s209 = ssub.s32 256, 256
      %210 = vsyncadd [#allocation10], %s209
      %s212 = sshll.u32 [#allocation9], 4
      %s213 = int_to_ptr.vmem [resolvable:$true] %s212
      %215 = dma.vmem_to_hbm [thread:$0]  %s213, 256, %s4, [#allocation10]
    $region33: #{tpu_custom_call.1} parent=1 // pred_fallthru
      _
    // Predicated region
    $region34: #{tpu_custom_call.1} parent=1 // pred_check
      _
    $region35: #{tpu_custom_call.1} parent=1 // pred_check_branch
      %217 = sbr.rel (0) target = $region37
    $region36: #{tpu_custom_call.1} parent=1 // pred_region
      %218 = dma.done [#allocation4], 256
    $region37: #{tpu_custom_call.1} parent=1 // pred_fallthru
      _
    // Predicated region
    $region38: #{tpu_custom_call.1} parent=1 // pred_check
      _
    $region39: #{tpu_custom_call.1} parent=1 // pred_check_branch
      %220 = sbr.rel (0) target = $region41
    $region40: #{tpu_custom_call.1} parent=1 // pred_region
      %221 = dma.done [#allocation10], 256
    $region41: #{tpu_custom_call.1} parent=1 // pred_fallthru
      _
    %222 = vsyncpa [#allocation3], 1
    %223 = vsyncpa [#allocation6], 1
    %224 = vsyncpa [#allocation4], 1
    %225 = vsyncpa [#allocation10], 1

</llo_original>
